<compile_context>
chip_gen: v5e
topology: v5e:2x2
jax: 0.10.0
libtpu: 0.0.40
codegen_flags: <defaults>
</compile_context>

<pallas_src>
import jax
import jax.numpy as jnp
from jax.experimental import pallas as pl
from jax.experimental.pallas import tpu as pltpu

KH = KW = 3  # Conv2dBN always uses a 3x3 kernel


def _stem_kernel(x_ref, w_ref, bias_ref, o_ref):
    # x_ref:    (1, Hpad+2, Wp*Cin)   zero-padded image, fused (W,Cin) lanes,
    #                                 resident across the row-tile grid axis
    # w_ref:    (KH, Wp*Cin, W*Cout)  block-banded weights (BN scale folded in)
    # bias_ref: (1, W*Cout)           folded bias (conv bias + BN shift), tiled over W
    # o_ref:    (1, TH, W*Cout)       one row-tile of the output, fused (W,Cout) lanes
    th = o_ref.shape[1]
    r0 = pl.multiple_of(pl.program_id(1) * th, th)     # first padded row of this tile

    acc = jnp.zeros(o_ref.shape[1:], jnp.float32)      # (TH, W*Cout), lives in vregs
    for kh in range(KH):                               # 3 matmuls, fully unrolled
        rows = x_ref[0, pl.ds(r0 + kh, th), :]         # (TH, Wp*Cin) full-lane slice
        acc = acc + jnp.dot(rows, w_ref[kh],
                            preferred_element_type=jnp.float32)

    y = jnp.maximum(acc + bias_ref[...], 0.0)          # folded bias + ReLU
    o_ref[0] = y.astype(o_ref.dtype)


def stem_block_nhwc(x_nhwc, w_fused, scale, bias, *, th=None):
    """x_nhwc: (N,H,W,Cin); w_fused: (3,3,Cin,Cout) HWIO; scale/bias: (Cout,)."""
    N, H, W, Cin = x_nhwc.shape
    Cout = w_fused.shape[-1]
    if th is None:
        th = min(32, pl.cdiv(H, 8) * 8)   # biggest cheap row tile (multiple of 8)
    assert th % 8 == 0, "row tile must be a multiple of 8 sublanes"
    hpad = pl.cdiv(H, th) * th            # round H up to the row-tile size
    wp = W + 2                            # 1-px horizontal halo

    # Fold BN scale into the conv weights: conv(x, w) * s == conv(x, w * s).
    w_s = (w_fused * scale[None, None, None, :]).astype(jnp.float32)

    # Expanded block-banded weight matrix, one per kh:
    #   B[kh, (w+kw)*Cin + ci, w*Cout + co] = w_s[kh, kw, ci, co]
    sel = (jnp.arange(wp)[:, None, None]
           == (jnp.arange(KW)[None, :, None] + jnp.arange(W)[None, None, :])
           ).astype(jnp.float32)                                   # (wp, KW, W)
    w_mat = jnp.einsum("pkw,hkio->hpiwo", sel, w_s).reshape(KH, wp * Cin, W * Cout)

    bias_row = jnp.tile(bias.astype(jnp.float32), W).reshape(1, W * Cout)

    # Zero-pad: 1-row halo top, (1 + hpad-H) rows bottom, 1-col halo left/right,
    # then fuse (W, Cin) into the lane dimension.
    x_p = jnp.pad(x_nhwc, ((0, 0), (1, 1 + hpad - H), (1, 1), (0, 0)))
    x_f = x_p.reshape(N, hpad + 2, wp * Cin)

    out_f = pl.pallas_call(
        _stem_kernel,
        out_shape=jax.ShapeDtypeStruct((N, hpad, W * Cout), x_nhwc.dtype),
        grid_spec=pltpu.PrefetchScalarGridSpec(
            num_scalar_prefetch=0,
            grid=(N, hpad // th),
            in_specs=[
                # padded image: constant over the row-tile axis -> stays resident
                pl.BlockSpec((1, hpad + 2, wp * Cin), lambda n, h: (n, 0, 0)),
                # weights / bias: constant index_map -> DMA'd once, kept resident
                pl.BlockSpec((KH, wp * Cin, W * Cout), lambda n, h: (0, 0, 0)),
                pl.BlockSpec((1, W * Cout), lambda n, h: (0, 0)),
            ],
            out_specs=pl.BlockSpec((1, th, W * Cout), lambda n, h: (n, h, 0)),
        ),
        compiler_params=pltpu.CompilerParams(
            dimension_semantics=("parallel", "parallel"),
            vmem_limit_bytes=32 * 1024 * 1024),
    )(x_f, w_mat, bias_row)

    return out_f.reshape(N, hpad, W, Cout)[:, :H]      # un-fuse lanes, trim H pad


def effective_stem_block_forward(x_nchw, params):
    """PyTorch-facing wrapper: NCHW in, NCHW out (channels = out_channels)."""
    x_nhwc = jnp.transpose(x_nchw, (0, 2, 3, 1))
    y_nhwc = stem_block_nhwc(x_nhwc, params["w_fused"],
                             params["scale"], params["bias"])
    return jnp.transpose(y_nhwc, (0, 3, 1, 2))


def init_params(key, in_channels, out_channels, eps=1e-5):
    c_half = out_channels // 2
    ks = jax.random.split(key, 12)      # distinct keys for every parameter

    def branch(kw_, kb_, kg_, kbt_, km_, kv_):
        w = jax.random.normal(kw_, (KH, KW, in_channels, c_half), jnp.float32) * 0.1
        b = jax.random.normal(kb_, (c_half,), jnp.float32) * 0.05
        gamma = 1.0 + 0.1 * jax.random.normal(kg_, (c_half,), jnp.float32)
        beta = 0.05 * jax.random.normal(kbt_, (c_half,), jnp.float32)
        mean = 0.05 * jax.random.normal(km_, (c_half,), jnp.float32)
        var = jax.random.uniform(kv_, (c_half,), jnp.float32, 0.5, 1.5)
        scale = gamma / jnp.sqrt(var + eps)          # fold BN
        bias = beta + (b - mean) * scale             # fold conv bias + BN shift
        return w, scale, bias

    w1, s1, b1 = branch(*ks[0:6])
    w2, s2, b2 = branch(*ks[6:12])

    return {
        # cat along out-channels == torch.cat(dim=1) of the two branch outputs
        "w_fused": jnp.concatenate([w1, w2], axis=-1),
        "scale": jnp.concatenate([s1, s2], axis=0),
        "bias": jnp.concatenate([b1, b2], axis=0),
    }


def _reference(x_nchw, params):
    x_nhwc = jnp.transpose(x_nchw, (0, 2, 3, 1))
    y = jax.lax.conv_general_dilated(
        x_nhwc, params["w_fused"], window_strides=(1, 1), padding="SAME",
        dimension_numbers=("NHWC", "HWIO", "NHWC"))
    y = y * params["scale"][None, None, None, :] + params["bias"][None, None, None, :]
    y = jnp.maximum(y, 0.0)
    return jnp.transpose(y, (0, 3, 1, 2))


if __name__ == "__main__":
    N, Cin, H, W = 2, 4, 16, 16
    out_channels = 16

    key = jax.random.PRNGKey(0)
    k_x, k_p = jax.random.split(key)
    x = jax.random.normal(k_x, (N, Cin, H, W), jnp.float32)   # NCHW like PyTorch
    params = init_params(k_p, Cin, out_channels)

    out = effective_stem_block_forward(x, params)
    out = jax.block_until_ready(out)

    ref = _reference(x, params)
    assert out.shape == (N, out_channels, H, W), out.shape
    err = float(jnp.max(jnp.abs(out - ref)))
    assert jnp.allclose(out, ref, rtol=1e-3, atol=1e-3), err

    print("KERNEL_OK")
</pallas_src>

<mosaic_0001>
module attributes {stable_mosaic.version = 11 : i64} {
  func.func @_stem_kernel(%arg0: i32, %arg1: i32, %arg2: memref<1x18x72xf32, #tpu.memory_space<vmem>>, %arg3: memref<3x72x256xf32, #tpu.memory_space<vmem>>, %arg4: memref<1x256xf32, #tpu.memory_space<vmem>>, %arg5: memref<1x16x256xf32, #tpu.memory_space<vmem>>) attributes {dimension_semantics = [#tpu.dimension_semantics<parallel>, #tpu.dimension_semantics<parallel>], iteration_bounds = array<i64: 2, 1>, scalar_prefetch = 0 : i64, scratch_operands = 0 : i64, tpu.core_type = #tpu.core_type<tc>, window_params = [{transform_indices = @transform_0, window_bounds = array<i64: 1, 18, 72>}, {pipeline_mode = #tpu.pipeline_mode<synchronous>, transform_indices = @transform_1, window_bounds = array<i64: 3, 72, 256>}, {pipeline_mode = #tpu.pipeline_mode<synchronous>, transform_indices = @transform_2, window_bounds = array<i64: 1, 256>}, {transform_indices = @transform_3, window_bounds = array<i64: 1, 16, 256>}]} {
    %c16_i32 = arith.constant 16 : i32
    %0 = arith.muli %arg1, %c16_i32 : i32
    %1 = tpu.assume_multiple %0, 16 : i32
    %cst = arith.constant 0.000000e+00 : f32
    %2 = vector.broadcast %cst : f32 to vector<16x256xf32>
    %c0_i32 = arith.constant 0 : i32
    %3 = arith.addi %1, %c0_i32 : i32
    %c0 = arith.constant 0 : index
    %4 = arith.index_cast %3 : i32 to index
    %c0_0 = arith.constant 0 : index
    %5 = vector.load %arg2[%c0, %4, %c0_0] : memref<1x18x72xf32, #tpu.memory_space<vmem>>, vector<1x16x72xf32>
    %6 = vector.shape_cast %5 : vector<1x16x72xf32> to vector<16x72xf32>
    %c0_1 = arith.constant 0 : index
    %c0_2 = arith.constant 0 : index
    %c0_3 = arith.constant 0 : index
    %7 = vector.load %arg3[%c0_1, %c0_2, %c0_3] : memref<3x72x256xf32, #tpu.memory_space<vmem>>, vector<1x72x256xf32>
    %8 = vector.shape_cast %7 : vector<1x72x256xf32> to vector<72x256xf32>
    %cst_4 = arith.constant dense<0.000000e+00> : vector<16x256xf32>
    %9 = tpu.matmul %6, %8, %cst_4 {dimension_numbers = #tpu.dot_dimension_numbers<[1], [0], [0], [1], [0, 0, 1, 1], [], []>} : vector<16x72xf32>, vector<72x256xf32>, vector<16x256xf32> -> vector<16x256xf32>
    %10 = arith.addf %2, %9 : vector<16x256xf32>
    %c1_i32 = arith.constant 1 : i32
    %11 = arith.addi %1, %c1_i32 : i32
    %c0_5 = arith.constant 0 : index
    %12 = arith.index_cast %11 : i32 to index
    %c0_6 = arith.constant 0 : index
    %13 = vector.load %arg2[%c0_5, %12, %c0_6] : memref<1x18x72xf32, #tpu.memory_space<vmem>>, vector<1x16x72xf32>
    %14 = vector.shape_cast %13 : vector<1x16x72xf32> to vector<16x72xf32>
    %c1 = arith.constant 1 : index
    %c0_7 = arith.constant 0 : index
    %c0_8 = arith.constant 0 : index
    %15 = vector.load %arg3[%c1, %c0_7, %c0_8] : memref<3x72x256xf32, #tpu.memory_space<vmem>>, vector<1x72x256xf32>
    %16 = vector.shape_cast %15 : vector<1x72x256xf32> to vector<72x256xf32>
    %cst_9 = arith.constant dense<0.000000e+00> : vector<16x256xf32>
    %17 = tpu.matmul %14, %16, %cst_9 {dimension_numbers = #tpu.dot_dimension_numbers<[1], [0], [0], [1], [0, 0, 1, 1], [], []>} : vector<16x72xf32>, vector<72x256xf32>, vector<16x256xf32> -> vector<16x256xf32>
    %18 = arith.addf %10, %17 : vector<16x256xf32>
    %c2_i32 = arith.constant 2 : i32
    %19 = arith.addi %1, %c2_i32 : i32
    %c0_10 = arith.constant 0 : index
    %20 = arith.index_cast %19 : i32 to index
    %c0_11 = arith.constant 0 : index
    %21 = vector.load %arg2[%c0_10, %20, %c0_11] : memref<1x18x72xf32, #tpu.memory_space<vmem>>, vector<1x16x72xf32>
    %22 = vector.shape_cast %21 : vector<1x16x72xf32> to vector<16x72xf32>
    %c2 = arith.constant 2 : index
    %c0_12 = arith.constant 0 : index
    %c0_13 = arith.constant 0 : index
    %23 = vector.load %arg3[%c2, %c0_12, %c0_13] : memref<3x72x256xf32, #tpu.memory_space<vmem>>, vector<1x72x256xf32>
    %24 = vector.shape_cast %23 : vector<1x72x256xf32> to vector<72x256xf32>
    %cst_14 = arith.constant dense<0.000000e+00> : vector<16x256xf32>
    %25 = tpu.matmul %22, %24, %cst_14 {dimension_numbers = #tpu.dot_dimension_numbers<[1], [0], [0], [1], [0, 0, 1, 1], [], []>} : vector<16x72xf32>, vector<72x256xf32>, vector<16x256xf32> -> vector<16x256xf32>
    %26 = arith.addf %18, %25 : vector<16x256xf32>
    %c0_15 = arith.constant 0 : index
    %c0_16 = arith.constant 0 : index
    %27 = vector.load %arg4[%c0_15, %c0_16] : memref<1x256xf32, #tpu.memory_space<vmem>>, vector<1x256xf32>
    %28 = vector.broadcast %27 : vector<1x256xf32> to vector<16x256xf32>
    %29 = arith.addf %26, %28 : vector<16x256xf32>
    %cst_17 = arith.constant 0.000000e+00 : f32
    %30 = vector.broadcast %cst_17 : f32 to vector<16x256xf32>
    %31 = arith.maximumf %29, %30 : vector<16x256xf32>
    %c0_18 = arith.constant 0 : index
    %c0_19 = arith.constant 0 : index
    %c0_20 = arith.constant 0 : index
    %32 = vector.load %arg5[%c0_18, %c0_19, %c0_20] : memref<1x16x256xf32, #tpu.memory_space<vmem>>, vector<1x16x256xf32>
    %33 = vector.shape_cast %32 : vector<1x16x256xf32> to vector<16x256xf32>
    %34 = vector.shape_cast %31 : vector<16x256xf32> to vector<1x16x256xf32>
    tpu.vector_store %arg5[%c0_18, %c0_19, %c0_20], %34 {strides = array<i32>} : memref<1x16x256xf32, #tpu.memory_space<vmem>>, vector<1x16x256xf32>,
    return
  }
  func.func @transform_0(%arg0: i32, %arg1: i32) -> (i32, i32, i32) {
    %c0_i32 = arith.constant 0 : i32
    %c0_i32_0 = arith.constant 0 : i32
    %c0_i32_1 = arith.constant 0 : i32
    return %arg0, %c0_i32, %c0_i32_0 : i32, i32, i32
  }
  func.func @transform_1(%arg0: i32, %arg1: i32) -> (i32, i32, i32) {
    %c0_i32 = arith.constant 0 : i32
    %c0_i32_0 = arith.constant 0 : i32
    %c0_i32_1 = arith.constant 0 : i32
    %c0_i32_2 = arith.constant 0 : i32
    return %c0_i32, %c0_i32_0, %c0_i32_1 : i32, i32, i32
  }
  func.func @transform_2(%arg0: i32, %arg1: i32) -> (i32, i32) {
    %c0_i32 = arith.constant 0 : i32
    %c0_i32_0 = arith.constant 0 : i32
    %c0_i32_1 = arith.constant 0 : i32
    return %c0_i32, %c0_i32_0 : i32, i32
  }
  func.func @transform_3(%arg0: i32, %arg1: i32) -> (i32, i32, i32) {
    %c0_i32 = arith.constant 0 : i32
    %c0_i32_0 = arith.constant 0 : i32
    return %arg0, %arg1, %c0_i32 : i32, i32, i32
  }
}

</mosaic_0001>

<llo_original>
// kernel: tpu_custom_call.1
$region0: #{tpu_custom_call.1}
  #allocation0 [shape = 'u32[]', space=smem, size = 0x4, offset = 0x4, fixed_abs, tag = 'smem constant byte address 0x4 - core index']
  #allocation1 [shape = 'u32[72,128]{1,0:T(1,128)}', space=vmem, size = 0x9000, scoped, tag = 'internal scratch']
  %s0 = inlined_call_operand.vmem [shape: f32[2,18,72], index: 0, kind: input, shape index: {}]
  %s1 = inlined_call_operand.hbm [shape: f32[3,72,256], index: 1, kind: input, shape index: {}]
  %s2 = inlined_call_operand.vmem [shape: f32[1,256], index: 2, kind: input, shape index: {}]
  %s3 = inlined_call_operand.hbm [shape: f32[2,16,256], index: 3, kind: output, shape index: {}]
  %s4 = sld [smem:[#allocation0]]
  $region49: #{tpu_custom_call.1} parent=0
    _
  %s6 = ssub.s32 1, %s4
  %s7 = scalar_select 0, %s6, %s4
  $region1: #{tpu_custom_call.1} parent=0
    #allocation2 [shape = 'u8[221184]{0}', space=vmem, size = 0x36000, scoped, tag = 'input window, operand 1, single buffered']
    #allocation3 [shape = 's32[2]{0}', space=sflag, size = 0x8, scoped, tag = 'scoped memory for tpu_custom_call.1']
    #allocation4 [shape = 's32[2]{0}', space=sflag, size = 0x8, scoped, tag = 'scoped memory for tpu_custom_call.1']
    #allocation5 [shape = 'u8[32768]{0}', space=vmem, size = 0x8000, scoped, tag = 'output window, operand 0']
    %8 = vsyncpa [#allocation3], 0
    %9 = vsyncpa [#allocation4], 0
    %s10 = scalar_lea.sflag [#allocation4], 1
    %11 = vsyncpa %s10, 0
    loop: start=0, step=1, limit=4
    $region2: #{tpu_custom_call.1} parent=1 // loop_pre_header
      _
    $region3: #{tpu_custom_call.1} parent=1 // loop_header
      %s13 = sphi 0, %s17
      %p14 = scmp.ge.s32.totalorder %s13, 4
      %s20 = sphi 0, %s32
      %s21 = sphi 0, %s28
      %s22 = sphi 0, %s20
      %s23 = sphi 0, %s21
      %s24 = sphi 0, %s22
      %s25 = sphi 0, %s23
      %s35 = sphi 0, %s37
      %s38 = sphi 0, %s35
      %s39 = sphi 0, %s38
      %s55 = sphi 0, %s39
      %s59 = sphi 0, %s59
      %s61 = sphi 0, %s59
      %s62 = sphi 0, %s61
      %s76 = sphi 0, %s62
      %s80 = sphi 0, %s80
      %s82 = sphi 0, %s80
      %s83 = sphi 0, %s82
      %s97 = sphi 0, %s83
      %s105 = sphi 0, %s107
      %s108 = sphi 0, %s105
      %s109 = sphi 0, %s108
      %s125 = sphi 0, %s109
    $region4: #{tpu_custom_call.1} parent=1 // loop_header_branch
      %16 = sbr.rel (%p14) target = $region8
    $region5: #{tpu_custom_call.1} parent=1 // loop_body
      %s18 = ssub.s32 %s13, 1
      %s19 = ssub.s32 %s13, 2
      %s26 = sadd.s32 1, %s21
      %p27 = scmp.ge.s32.totalorder %s26, 1
      %s28 = scalar_select %p27, 0, %s26
      %s29 = sadd.s32 1, %s20
      %s30 = scalar_select %p27, %s29, %s20
      %p31 = scmp.ge.s32.totalorder %s30, 2
      %s32 = scalar_select %p31, 0, %s30
      %s33 = ssub.s32 %s20, %s32
      %p34 = scmp.eq.s32.totalorder %s33, 0
      %s36 = sadd.s32 %s35, 1
      %s37 = scalar_select %p34, %s35, %s36
      %p40 = pneg %p34
      %p41 = scmp.eq.s32.totalorder %s13, 1
      %p42 = por %p40, %p41
      %p43 = scmp.ne.s32.totalorder %s35, %s38
      %p44 = scmp.eq.s32.totalorder %s13, 0
      %p45 = por %p43, %p44
      %p46 = scmp.ne.s32.totalorder %s35, %s38
      %p47 = scmp.eq.s32.totalorder %s18, 1
      %p48 = por %p46, %p47
      %p49 = scmp.ne.s32.totalorder %s38, %s39
      %p50 = scmp.eq.s32.totalorder %s18, 0
      %p51 = por %p49, %p50
      %p52 = scmp.ne.s32.totalorder %s38, %s39
      %p53 = scmp.eq.s32.totalorder %s19, 1
      %p54 = por %p52, %p53
      %p56 = scmp.ne.s32.totalorder %s39, %s55
      %p57 = scmp.eq.s32.totalorder %s19, 0
      %p58 = por %p56, %p57
      %s60 = sadd.s32 %s59, 1
      %p63 = scmp.eq.s32.totalorder %s13, 1
      %p64 = scmp.ne.s32.totalorder %s59, %s61
      %p65 = scmp.eq.s32.totalorder %s13, 0
      %p66 = por %p64, %p65
      %p67 = scmp.ne.s32.totalorder %s59, %s61
      %p68 = scmp.eq.s32.totalorder %s18, 1
      %p69 = por %p67, %p68
      %p70 = scmp.ne.s32.totalorder %s61, %s62
      %p71 = scmp.eq.s32.totalorder %s18, 0
      %p72 = por %p70, %p71
      %p73 = scmp.ne.s32.totalorder %s61, %s62
      %p74 = scmp.eq.s32.totalorder %s19, 1
      %p75 = por %p73, %p74
      %p77 = scmp.ne.s32.totalorder %s62, %s76
      %p78 = scmp.eq.s32.totalorder %s19, 0
      %p79 = por %p77, %p78
      %s81 = sadd.s32 %s80, 1
      %p84 = scmp.eq.s32.totalorder %s13, 1
      %p85 = scmp.ne.s32.totalorder %s80, %s82
      %p86 = scmp.eq.s32.totalorder %s13, 0
      %p87 = por %p85, %p86
      %p88 = scmp.ne.s32.totalorder %s80, %s82
      %p89 = scmp.eq.s32.totalorder %s18, 1
      %p90 = por %p88, %p89
      %p91 = scmp.ne.s32.totalorder %s82, %s83
      %p92 = scmp.eq.s32.totalorder %s18, 0
      %p93 = por %p91, %p92
      %p94 = scmp.ne.s32.totalorder %s82, %s83
      %p95 = scmp.eq.s32.totalorder %s19, 1
      %p96 = por %p94, %p95
      %p98 = scmp.ne.s32.totalorder %s83, %s97
      %p99 = scmp.eq.s32.totalorder %s19, 0
      %p100 = por %p98, %p99
      %s101 = ssub.s32 %s20, %s32
      %s102 = ssub.s32 %s21, %s28
      %s103 = sor.u32 %s101, %s102
      %p104 = scmp.eq.s32.totalorder %s103, 0
      %s106 = sadd.s32 %s105, 1
      %s107 = scalar_select %p104, %s105, %s106
      %p110 = pneg %p104
      %p111 = scmp.eq.s32.totalorder %s13, 1
      %p112 = por %p110, %p111
      %p113 = scmp.ne.s32.totalorder %s105, %s108
      %p114 = scmp.eq.s32.totalorder %s13, 0
      %p115 = por %p113, %p114
      %p116 = scmp.ne.s32.totalorder %s105, %s108
      %p117 = scmp.eq.s32.totalorder %s18, 1
      %p118 = por %p116, %p117
      %p119 = scmp.ne.s32.totalorder %s108, %s109
      %p120 = scmp.eq.s32.totalorder %s18, 0
      %p121 = por %p119, %p120
      %p122 = scmp.ne.s32.totalorder %s108, %s109
      %p123 = scmp.eq.s32.totalorder %s19, 1
      %p124 = por %p122, %p123
      %p126 = scmp.ne.s32.totalorder %s109, %s125
      %p127 = scmp.eq.s32.totalorder %s19, 0
      %p128 = por %p126, %p127
      %p129 = scmp.le.s32.totalorder 1, %s13
      %p130 = scmp.lt.s32.totalorder %s13, 3
      %p131 = pnand %p129, %p130
      %p132 = pneg %p131
      // Predicated region
      $region9: #{tpu_custom_call.1} parent=5 // pred_check
        _
      $region10: #{tpu_custom_call.1} parent=5 // pred_check_branch
        %134 = sbr.rel (%p131) target = $region12
      $region11: #{tpu_custom_call.1} parent=5 // pred_region
        %s135 = ssub.s32 %s13, 1
        // Predicated region
        $region13: #{tpu_custom_call.1} parent=11 // pred_check
          %p136 = pneg %p72
        $region14: #{tpu_custom_call.1} parent=11 // pred_check_branch
          %138 = sbr.rel (%p136) target = $region16
        $region15: #{tpu_custom_call.1} parent=11 // pred_region
          %140 = vsyncadd [#allocation3], 0
          %s141 = sshll.u32 %s1, 4
          %s142 = int_to_ptr.hbm [resolvable:$true] %s141
          %s143 = sshll.u32 [#allocation2], 4
          %s144 = int_to_ptr.vmem [resolvable:$true] %s143
          %149 = dma.hbm_to_vmem [thread:$0]  %s142, 6912, %s144, [#allocation3], 256, 256, 16
        $region16: #{tpu_custom_call.1} parent=11 // pred_fallthru
          _
        // Predicated region
        $region17: #{tpu_custom_call.1} parent=11 // pred_check
          %p150 = pneg %p93
        $region18: #{tpu_custom_call.1} parent=11 // pred_check_branch
          %152 = sbr.rel (%p150) target = $region20
        $region19: #{tpu_custom_call.1} parent=11 // pred_region
          _
        $region20: #{tpu_custom_call.1} parent=11 // pred_fallthru
          _
      $region12: #{tpu_custom_call.1} parent=5 // pred_fallthru
        _
      %p153 = scmp.lt.s32.totalorder %s13, 2
      // Predicated region
      $region21: #{tpu_custom_call.1} parent=5 // pred_check
        %p154 = pneg %p153
      $region22: #{tpu_custom_call.1} parent=5 // pred_check_branch
        %156 = sbr.rel (%p154) target = $region24
      $region23: #{tpu_custom_call.1} parent=5 // pred_region
        // Predicated region
        $region25: #{tpu_custom_call.1} parent=23 // pred_check
          %p157 = pneg %p45
        $region26: #{tpu_custom_call.1} parent=23 // pred_check_branch
          %159 = sbr.rel (%p157) target = $region28
        $region27: #{tpu_custom_call.1} parent=23 // pred_region
          %p160 = scmp.lt.s32.totalorder %s20, 1
          %s161 = scalar_select %p160, %s20, 1
          %s162 = smul.addr %s161, 3
          %s163 = smul.addr %s162, 8
          %s164 = scalar_lea.vmem %s0, %s163
        $region28: #{tpu_custom_call.1} parent=23 // pred_fallthru
          _
      $region24: #{tpu_custom_call.1} parent=5 // pred_fallthru
        _
      %p165 = scmp.le.s32.totalorder 1, %s13
      %p166 = scmp.lt.s32.totalorder %s13, 3
      %p167 = pnand %p165, %p166
      %p168 = pneg %p167
      // Predicated region
      $region29: #{tpu_custom_call.1} parent=5 // pred_check
        _
      $region30: #{tpu_custom_call.1} parent=5 // pred_check_branch
        %170 = sbr.rel (%p167) target = $region32
      $region31: #{tpu_custom_call.1} parent=5 // pred_region
        %s171 = ssub.s32 %s13, 1
        // Predicated region
        $region33: #{tpu_custom_call.1} parent=31 // pred_check
          %p172 = pneg %p72
        $region34: #{tpu_custom_call.1} parent=31 // pred_check_branch
          %174 = sbr.rel (%p172) target = $region36
        $region35: #{tpu_custom_call.1} parent=31 // pred_region
          %176 = dma.done [#allocation3], 6912
        $region36: #{tpu_custom_call.1} parent=31 // pred_fallthru
          _
        %p177 = scmp.lt.s32.totalorder %s22, 1
        %s178 = scalar_select %p177, %s22, 1
        %s179 = smul.addr %s178, 3
        %s180 = smul.addr %s179, 8
        %s181 = scalar_lea.vmem %s0, %s180
        %p182 = pneg %p51
        %p183 = pneg %p48
        %p184 = pneg %p72
        %p185 = pneg %p69
        %p186 = pneg %p93
        %p187 = pneg %p90
        %p188 = pneg %p121
        %p189 = pneg %p118
        %s190 = sand.u32 %s108, 1
        %s191 = scalar_lea.sflag [#allocation4], %s190
        %s192 = sand.u32 %s108, 1
        %s193 = smul.addr %s192, 32
        %s194 = scalar_lea.vmem [#allocation5], %s193
        %p195 = scmp.lt.s32.totalorder %s22, 1
        %s196 = scalar_select %p195, %s22, 1
        %s197 = smul.addr %s196, 3
        %s198 = smul.addr %s197, 8
        %s199 = scalar_lea.vmem %s0, %s198
        %s200 = smul.u32 2, %s23
        %s201 = smul.u32 %s23, 16
        %s202 = scalar_lea.vmem %s199, %s201
        %v203 = vld [vmem:[%s202] sm:$0xff]
        %v204 = vld [vmem:[%s202 + $0x8] sm:$0xff]
        %v205 = vld [vmem:[#allocation2] sm:$0xff]
        %v206 = vld [vmem:[#allocation2 + $0x8] sm:$0xff]
        %v207 = vld [vmem:[#allocation2 + $0x10] sm:$0xff]
        %v208 = vld [vmem:[#allocation2 + $0x18] sm:$0xff]
        %v209 = vld [vmem:[#allocation2 + $0x20] sm:$0xff]
        %v210 = vld [vmem:[#allocation2 + $0x28] sm:$0xff]
        %v211 = vld [vmem:[#allocation2 + $0x30] sm:$0xff]
        %v212 = vld [vmem:[#allocation2 + $0x38] sm:$0xff]
        %v213 = vld [vmem:[#allocation2 + $0x40] sm:$0xff]
        %v214 = vld [vmem:[#allocation2 + $0x48] sm:$0xff]
        %v215 = vld [vmem:[#allocation2 + $0x50] sm:$0xff]
        %v216 = vld [vmem:[#allocation2 + $0x58] sm:$0xff]
        %v217 = vld [vmem:[#allocation2 + $0x60] sm:$0xff]
        %v218 = vld [vmem:[#allocation2 + $0x68] sm:$0xff]
        %v219 = vld [vmem:[#allocation2 + $0x70] sm:$0xff]
        %v220 = vld [vmem:[#allocation2 + $0x78] sm:$0xff]
        %v221 = vld [vmem:[#allocation2 + $0x80] sm:$0xff]
        %v222 = vld [vmem:[#allocation2 + $0x88] sm:$0xff]
        %s223 = sadd.s32 %s201, 1
        %s224 = scalar_lea.vmem %s199, %s223
        %v225 = vld [vmem:[%s224] sm:$0xff]
        %v226 = vld [vmem:[%s224 + $0x8] sm:$0xff]
        %s227 = scalar_lea.vmem [#allocation2], 144
        %v228 = vld [vmem:[%s227] sm:$0xff]
        %v229 = vld [vmem:[%s227 + $0x8] sm:$0xff]
        %v230 = vld [vmem:[%s227 + $0x10] sm:$0xff]
        %v231 = vld [vmem:[%s227 + $0x18] sm:$0xff]
        %v232 = vld [vmem:[%s227 + $0x20] sm:$0xff]
        %v233 = vld [vmem:[%s227 + $0x28] sm:$0xff]
        %v234 = vld [vmem:[%s227 + $0x30] sm:$0xff]
        %v235 = vld [vmem:[%s227 + $0x38] sm:$0xff]
        %v236 = vld [vmem:[%s227 + $0x40] sm:$0xff]
        %v237 = vld [vmem:[%s227 + $0x48] sm:$0xff]
        %v238 = vld [vmem:[%s227 + $0x50] sm:$0xff]
        %v239 = vld [vmem:[%s227 + $0x58] sm:$0xff]
        %v240 = vld [vmem:[%s227 + $0x60] sm:$0xff]
        %v241 = vld [vmem:[%s227 + $0x68] sm:$0xff]
        %v242 = vld [vmem:[%s227 + $0x70] sm:$0xff]
        %v243 = vld [vmem:[%s227 + $0x78] sm:$0xff]
        %v244 = vld [vmem:[%s227 + $0x80] sm:$0xff]
        %v245 = vld [vmem:[%s227 + $0x88] sm:$0xff]
        %vm246 = vcmask 588800
        %v248 = vsel %vm246, %v225, 0
        %v251 = vsel %vm246, %v226, 0
        %253 = vmatpush.msra.mxu0 0.0
        %254 = vmatpush.msra.mxu0 0.0
        %255 = vmatpush.msra.mxu0 0.0
        %256 = vmatpush.msra.mxu0 0.0
        %257 = vmatpush.msra.mxu0 0.0
        %258 = vmatpush.msra.mxu0 0.0
        %259 = vmatpush.msra.mxu0 0.0
        %260 = vmatpush.msra.mxu0 %v244
        %261 = vmatpush.msra.mxu0 %v242
        %262 = vmatpush.msra.mxu0 %v240
        %263 = vmatpush.msra.mxu0 %v238
        %264 = vmatpush.msra.mxu0 %v236
        %265 = vmatpush.msra.mxu0 %v234
        %266 = vmatpush.msra.mxu0 %v232
        %267 = vmatpush.msra.mxu0 %v230
        %268 = vmatpush.msra.mxu0 %v228
        %269 = vmatmul.f32.gmra.mxu0 %v248
        %v270 = vpop.f32.mrf.mxu0
        %v271 = vadd.f32 0.0, %v270
        %272 = vmatmul.f32.gmra.mxu0 %v251
        %v273 = vpop.f32.mrf.mxu0
        %v274 = vadd.f32 0.0, %v273
        %275 = vdwg.mxu0
        %276 = vmatpush.msra.mxu0 0.0
        %277 = vmatpush.msra.mxu0 0.0
        %278 = vmatpush.msra.mxu0 0.0
        %279 = vmatpush.msra.mxu0 0.0
        %280 = vmatpush.msra.mxu0 0.0
        %281 = vmatpush.msra.mxu0 0.0
        %282 = vmatpush.msra.mxu0 0.0
        %283 = vmatpush.msra.mxu0 %v245
        %284 = vmatpush.msra.mxu0 %v243
        %285 = vmatpush.msra.mxu0 %v241
        %286 = vmatpush.msra.mxu0 %v239
        %287 = vmatpush.msra.mxu0 %v237
        %288 = vmatpush.msra.mxu0 %v235
        %289 = vmatpush.msra.mxu0 %v233
        %290 = vmatpush.msra.mxu0 %v231
        %291 = vmatpush.msra.mxu0 %v229
        %292 = vmatmul.f32.gmra.mxu0 %v248
        %v293 = vpop.f32.mrf.mxu0
        %v294 = vadd.f32 0.0, %v293
        %295 = vmatmul.f32.gmra.mxu0 %v251
        %v296 = vpop.f32.mrf.mxu0
        %v297 = vadd.f32 0.0, %v296
        %298 = vdwg.mxu0
        %v300 = vsel %vm246, %v203, 0
        %v303 = vsel %vm246, %v204, 0
        %305 = vmatpush.msra.mxu0 0.0
        %306 = vmatpush.msra.mxu0 0.0
        %307 = vmatpush.msra.mxu0 0.0
        %308 = vmatpush.msra.mxu0 0.0
        %309 = vmatpush.msra.mxu0 0.0
        %310 = vmatpush.msra.mxu0 0.0
        %311 = vmatpush.msra.mxu0 0.0
        %312 = vmatpush.msra.mxu0 %v221
        %313 = vmatpush.msra.mxu0 %v219
        %314 = vmatpush.msra.mxu0 %v217
        %315 = vmatpush.msra.mxu0 %v215
        %316 = vmatpush.msra.mxu0 %v213
        %317 = vmatpush.msra.mxu0 %v211
        %318 = vmatpush.msra.mxu0 %v209
        %319 = vmatpush.msra.mxu0 %v207
        %320 = vmatpush.msra.mxu0 %v205
        %321 = vmatmul.f32.gmra.mxu0 %v300
        %v322 = vpop.f32.mrf.mxu0
        %v323 = vadd.f32 %v271, %v322
        %324 = vmatmul.f32.gmra.mxu0 %v303
        %v325 = vpop.f32.mrf.mxu0
        %v326 = vadd.f32 %v274, %v325
        %327 = vdwg.mxu0
        %328 = vmatpush.msra.mxu0 0.0
        %329 = vmatpush.msra.mxu0 0.0
        %330 = vmatpush.msra.mxu0 0.0
        %331 = vmatpush.msra.mxu0 0.0
        %332 = vmatpush.msra.mxu0 0.0
        %333 = vmatpush.msra.mxu0 0.0
        %334 = vmatpush.msra.mxu0 0.0
        %335 = vmatpush.msra.mxu0 %v222
        %336 = vmatpush.msra.mxu0 %v220
        %337 = vmatpush.msra.mxu0 %v218
        %338 = vmatpush.msra.mxu0 %v216
        %339 = vmatpush.msra.mxu0 %v214
        %340 = vmatpush.msra.mxu0 %v212
        %341 = vmatpush.msra.mxu0 %v210
        %342 = vmatpush.msra.mxu0 %v208
        %343 = vmatpush.msra.mxu0 %v206
        %344 = vmatmul.f32.gmra.mxu0 %v300
        %v345 = vpop.f32.mrf.mxu0
        %v346 = vadd.f32 %v294, %v345
        %347 = vmatmul.f32.gmra.mxu0 %v303
        %v348 = vpop.f32.mrf.mxu0
        %v349 = vadd.f32 %v297, %v348
        %350 = vdwg.mxu0
        %s351 = sadd.s32 %s201, 2
        %s352 = scalar_lea.vmem %s199, %s351
        %v353 = vld [vmem:[%s352] sm:$0xff]
        %v354 = vld [vmem:[%s352 + $0x8] sm:$0xff]
        %s355 = scalar_lea.vmem [#allocation2], 288
        %v356 = vld [vmem:[%s355] sm:$0xff]
        %v357 = vld [vmem:[%s355 + $0x8] sm:$0xff]
        %v358 = vld [vmem:[%s355 + $0x10] sm:$0xff]
        %v359 = vld [vmem:[%s355 + $0x18] sm:$0xff]
        %v360 = vld [vmem:[%s355 + $0x20] sm:$0xff]
        %v361 = vld [vmem:[%s355 + $0x28] sm:$0xff]
        %v362 = vld [vmem:[%s355 + $0x30] sm:$0xff]
        %v363 = vld [vmem:[%s355 + $0x38] sm:$0xff]
        %v364 = vld [vmem:[%s355 + $0x40] sm:$0xff]
        %v365 = vld [vmem:[%s355 + $0x48] sm:$0xff]
        %v366 = vld [vmem:[%s355 + $0x50] sm:$0xff]
        %v367 = vld [vmem:[%s355 + $0x58] sm:$0xff]
        %v368 = vld [vmem:[%s355 + $0x60] sm:$0xff]
        %v369 = vld [vmem:[%s355 + $0x68] sm:$0xff]
        %v370 = vld [vmem:[%s355 + $0x70] sm:$0xff]
        %v371 = vld [vmem:[%s355 + $0x78] sm:$0xff]
        %v372 = vld [vmem:[%s355 + $0x80] sm:$0xff]
        %v373 = vld [vmem:[%s355 + $0x88] sm:$0xff]
        %v375 = vsel %vm246, %v353, 0
        %v378 = vsel %vm246, %v354, 0
        %380 = vmatpush.msra.mxu0 0.0
        %381 = vmatpush.msra.mxu0 0.0
        %382 = vmatpush.msra.mxu0 0.0
        %383 = vmatpush.msra.mxu0 0.0
        %384 = vmatpush.msra.mxu0 0.0
        %385 = vmatpush.msra.mxu0 0.0
        %386 = vmatpush.msra.mxu0 0.0
        %387 = vmatpush.msra.mxu0 %v372
        %388 = vmatpush.msra.mxu0 %v370
        %389 = vmatpush.msra.mxu0 %v368
        %390 = vmatpush.msra.mxu0 %v366
        %391 = vmatpush.msra.mxu0 %v364
        %392 = vmatpush.msra.mxu0 %v362
        %393 = vmatpush.msra.mxu0 %v360
        %394 = vmatpush.msra.mxu0 %v358
        %395 = vmatpush.msra.mxu0 %v356
        %396 = vmatmul.f32.gmra.mxu0 %v375
        %v397 = vpop.f32.mrf.mxu0
        %v398 = vadd.f32 0.0, %v397
        %399 = vmatmul.f32.gmra.mxu0 %v378
        %v400 = vpop.f32.mrf.mxu0
        %v401 = vadd.f32 0.0, %v400
        %402 = vdwg.mxu0
        %403 = vmatpush.msra.mxu0 0.0
        %404 = vmatpush.msra.mxu0 0.0
        %405 = vmatpush.msra.mxu0 0.0
        %406 = vmatpush.msra.mxu0 0.0
        %407 = vmatpush.msra.mxu0 0.0
        %408 = vmatpush.msra.mxu0 0.0
        %409 = vmatpush.msra.mxu0 0.0
        %410 = vmatpush.msra.mxu0 %v373
        %411 = vmatpush.msra.mxu0 %v371
        %412 = vmatpush.msra.mxu0 %v369
        %413 = vmatpush.msra.mxu0 %v367
        %414 = vmatpush.msra.mxu0 %v365
        %415 = vmatpush.msra.mxu0 %v363
        %416 = vmatpush.msra.mxu0 %v361
        %417 = vmatpush.msra.mxu0 %v359
        %418 = vmatpush.msra.mxu0 %v357
        %419 = vmatmul.f32.gmra.mxu0 %v375
        %v420 = vpop.f32.mrf.mxu0
        %v421 = vadd.f32 0.0, %v420
        %422 = vmatmul.f32.gmra.mxu0 %v378
        %v423 = vpop.f32.mrf.mxu0
        %v424 = vadd.f32 0.0, %v423
        %425 = vdwg.mxu0
        %v426 = vadd.f32 %v323, %v398
        %v427 = vadd.f32 %v346, %v421
        %v428 = vadd.f32 %v326, %v401
        %v429 = vadd.f32 %v349, %v424
        %v430 = vld [vmem:[%s2] sm:$0x3]
        %v432 = vperm.slane %v430, 0
        %v433 = vperm.slane %v430, 1
        %v436 = vadd.f32 %v426, %v432
        %v437 = vadd.f32 %v427, %v433
        %v438 = vadd.f32 %v428, %v432
        %v439 = vadd.f32 %v429, %v433
        %v440 = vmax.f32 %v436, 0.0
        %v441 = vmax.f32 %v437, 0.0
        %v442 = vmax.f32 %v438, 0.0
        %v443 = vmax.f32 %v439, 0.0
        %444 = vst [vmem:[%s194] sm:$0xff] %v440
        %445 = vst [vmem:[%s194 + $0x8] sm:$0xff] %v441
        %446 = vst [vmem:[%s194 + $0x10] sm:$0xff] %v442
        %447 = vst [vmem:[%s194 + $0x18] sm:$0xff] %v443
        %s448 = sand.u32 %s108, 1
        %s449 = scalar_lea.sflag [#allocation4], %s448
        %s450 = sand.u32 %s108, 1
        %s451 = smul.addr %s450, 32
        %s452 = scalar_lea.vmem [#allocation5], %s451
        // Predicated region
        $region37: #{tpu_custom_call.1} parent=31 // pred_check
          %p453 = pneg %p118
        $region38: #{tpu_custom_call.1} parent=31 // pred_check_branch
          %455 = sbr.rel (%p453) target = $region40
        $region39: #{tpu_custom_call.1} parent=31 // pred_region
          %s456 = smul.u32 2, %s23
          %458 = vsyncadd %s449, 0
          %s459 = smul.addr %s456, 2
          %s460 = smul.addr %s22, 4
          %s461 = sadd.s32 %s459, %s460
          %s462 = smul.addr %s461, 8
          %s463 = scalar_lea.hbm %s3, %s462
          %s464 = sshll.u32 %s452, 4
          %s465 = int_to_ptr.vmem [resolvable:$true] %s464
          %s466 = sshll.u32 %s463, 4
          %s467 = int_to_ptr.hbm [resolvable:$true] %s466
          %472 = dma.vmem_to_hbm [thread:$0]  %s465, 512, %s467, %s449, 256, 256, 16
        $region40: #{tpu_custom_call.1} parent=31 // pred_fallthru
          _
      $region32: #{tpu_custom_call.1} parent=5 // pred_fallthru
        _
      %p473 = scmp.le.s32.totalorder 2, %s13
      // Predicated region
      $region41: #{tpu_custom_call.1} parent=5 // pred_check
        %p474 = pneg %p473
      $region42: #{tpu_custom_call.1} parent=5 // pred_check_branch
        %476 = sbr.rel (%p474) target = $region44
      $region43: #{tpu_custom_call.1} parent=5 // pred_region
        %s477 = ssub.s32 %s13, 2
        // Predicated region
        $region45: #{tpu_custom_call.1} parent=43 // pred_check
          %p478 = pneg %p124
        $region46: #{tpu_custom_call.1} parent=43 // pred_check_branch
          %480 = sbr.rel (%p478) target = $region48
        $region47: #{tpu_custom_call.1} parent=43 // pred_region
          %s481 = sand.u32 %s109, 1
          %s482 = scalar_lea.sflag [#allocation4], %s481
          %s483 = sand.u32 %s109, 1
          %s484 = smul.addr %s483, 32
          %s485 = scalar_lea.vmem [#allocation5], %s484
          %487 = dma.done %s482, 512
        $region48: #{tpu_custom_call.1} parent=43 // pred_fallthru
          _
      $region44: #{tpu_custom_call.1} parent=5 // pred_fallthru
        _
    $region6: #{tpu_custom_call.1} parent=1 // loop_footer
      %s17 = sadd.s32 1, %s13
    $region7: #{tpu_custom_call.1} parent=1 // loop_footer_branch
      %12 = sbr.rel target = $region3
    $region8: #{tpu_custom_call.1} parent=1 // loop_exit
      _
    %488 = vsyncpa [#allocation3], 1
    %s489 = scalar_lea.sflag [#allocation3], 1
    %490 = vsyncpa %s489, 1
    %491 = vsyncpa [#allocation4], 1
    %s492 = scalar_lea.sflag [#allocation4], 1
    %493 = vsyncpa %s492, 1

</llo_original>
